<compile_context>
chip_gen: v6e
topology: v6e:2x2x1
jax: 0.10.0
libtpu: 0.0.40
codegen_flags: <defaults>
</compile_context>

<pallas_src>
import functools
import math

import jax
import jax.numpy as jnp
from jax import lax
from jax.experimental import pallas as pl
from jax.experimental.pallas import tpu as pltpu


_VMEM_LIMIT = 64 * 1024 * 1024  # explicit limit; fits v7x's 64 MiB physical VMEM


def _compiler_params(n_grid_axes=1):
    return pltpu.CompilerParams(
        dimension_semantics=("parallel",) * n_grid_axes,
        vmem_limit_bytes=_VMEM_LIMIT,
    )


# ---------------------------------------------------------------------------
# Kernel 1: fused QKV projection
#   q = (src+pos) @ Wq + bq ; k = (src+pos) @ Wk + bk   (single (E,2E) matmul)
#   v = src @ Wv + bv
# ---------------------------------------------------------------------------
def _qkv_proj_kernel(src_ref, pos_ref, wqk_ref, bqk_ref, wv_ref, bv_ref,
                     q_ref, k_ref, v_ref):
    e = q_ref.shape[-1]
    x = src_ref[...]
    xp = x + pos_ref[...]
    qk = jnp.dot(xp, wqk_ref[...], preferred_element_type=jnp.float32)
    qk = qk + bqk_ref[...]
    q_ref[...] = qk[:, :e].astype(q_ref.dtype)
    k_ref[...] = qk[:, e:].astype(k_ref.dtype)
    v = jnp.dot(x, wv_ref[...], preferred_element_type=jnp.float32) + bv_ref[...]
    v_ref[...] = v.astype(v_ref.dtype)


def pallas_qkv_proj(src2d, pos2d, wqk_t, bqk, wv_t, bv, *, tile_m=256):
    M, E = src2d.shape
    tm = M if M <= tile_m else tile_m
    row = lambda i: (i, 0)
    rep = lambda i: (0, 0)
    out_sds = jax.ShapeDtypeStruct((M, E), src2d.dtype)
    return pl.pallas_call(
        _qkv_proj_kernel,
        out_shape=(out_sds, out_sds, out_sds),
        grid=(pl.cdiv(M, tm),),
        in_specs=[
            pl.BlockSpec((tm, E), row),        # src tile
            pl.BlockSpec((tm, E), row),        # pos tile
            pl.BlockSpec((E, 2 * E), rep),     # fused Wq|Wk (stays resident)
            pl.BlockSpec((1, 2 * E), rep),
            pl.BlockSpec((E, E), rep),         # Wv
            pl.BlockSpec((1, E), rep),
        ],
        out_specs=(pl.BlockSpec((tm, E), row),
                   pl.BlockSpec((tm, E), row),
                   pl.BlockSpec((tm, E), row)),
        compiler_params=_compiler_params(1),
    )(src2d, pos2d, wqk_t, bqk, wv_t, bv)


# ---------------------------------------------------------------------------
# Kernel 2: multi-head attention + out-projection + residual + LayerNorm1
# Grid over batch; one (S, E) slab per step (all heads processed in-step).
# Head merge is fused into the output projection:
#   attn @ Wo = sum_h attn_h @ Wo[h*D:(h+1)*D, :]
# ---------------------------------------------------------------------------
def _attn_block_kernel(q_ref, k_ref, v_ref, src_ref, wo_ref, bo_ref,
                       g_ref, b_ref, o_ref, *, nhead, eps):
    S, E = q_ref.shape
    D = E // nhead
    scale = 1.0 / math.sqrt(D)
    q = q_ref[...]
    k = k_ref[...]
    v = v_ref[...]

    # TODO(synk): for long sequences this should become a flash-style
    # online-softmax tiled over the KV axis instead of a full (S,S) score block.
    y = jnp.zeros((S, E), jnp.float32)
    for h in range(nhead):                     # heads = contiguous lane slices of E
        sl = slice(h * D, (h + 1) * D)
        qh = q[:, sl]
        kh = k[:, sl]
        vh = v[:, sl]
        # contract on D of both operands (no explicit k.T relayout)
        s = lax.dot_general(qh, kh, (((1,), (1,)), ((), ())),
                            preferred_element_type=jnp.float32) * scale
        s = s - jnp.max(s, axis=-1, keepdims=True)
        e = jnp.exp(s)
        p = e * pl.reciprocal(jnp.sum(e, axis=-1, keepdims=True))
        oh = jnp.dot(p.astype(vh.dtype), vh, preferred_element_type=jnp.float32)
        y = y + jnp.dot(oh.astype(wo_ref.dtype), wo_ref[sl, :],
                        preferred_element_type=jnp.float32)
    y = y + bo_ref[...]

    # residual + LayerNorm1 (stats in f32, rsqrt on the EUP path)
    z = src_ref[...].astype(jnp.float32) + y
    m = jnp.mean(z, axis=-1, keepdims=True)
    zc = z - m
    var = jnp.mean(zc * zc, axis=-1, keepdims=True)
    zn = zc * lax.rsqrt(var + eps)
    o_ref[...] = (zn * g_ref[...] + b_ref[...]).astype(o_ref.dtype)


def pallas_attention_block(q3, k3, v3, src_b, wo_t, bo, g, b, *, nhead, eps=1e-5):
    Nb, S, E = q3.shape
    blk = lambda n: (n, 0, 0)
    rep = lambda n: (0, 0)
    return pl.pallas_call(
        functools.partial(_attn_block_kernel, nhead=nhead, eps=eps),
        out_shape=jax.ShapeDtypeStruct((Nb, S, E), q3.dtype),
        grid=(Nb,),
        in_specs=[
            pl.BlockSpec((None, S, E), blk),   # q  (batch dim squeezed)
            pl.BlockSpec((None, S, E), blk),   # k
            pl.BlockSpec((None, S, E), blk),   # v
            pl.BlockSpec((None, S, E), blk),   # src (residual)
            pl.BlockSpec((E, E), rep),         # Wo (stays resident)
            pl.BlockSpec((1, E), rep),
            pl.BlockSpec((1, E), rep),
            pl.BlockSpec((1, E), rep),
        ],
        out_specs=pl.BlockSpec((None, S, E), blk),
        compiler_params=_compiler_params(1),
    )(q3, k3, v3, src_b, wo_t, bo, g, b)


# ---------------------------------------------------------------------------
# Kernel 3: FFN (linear1 + ReLU + linear2) + residual + LayerNorm2
# ---------------------------------------------------------------------------
def _ffn_ln_kernel(x_ref, w1_ref, b1_ref, w2_ref, b2_ref, g_ref, b_ref, o_ref,
                   *, eps):
    x = x_ref[...]
    h = jnp.dot(x, w1_ref[...], preferred_element_type=jnp.float32) + b1_ref[...]
    h = jnp.maximum(h, 0.0)
    y = jnp.dot(h.astype(w2_ref.dtype), w2_ref[...],
                preferred_element_type=jnp.float32) + b2_ref[...]
    z = x.astype(jnp.float32) + y
    m = jnp.mean(z, axis=-1, keepdims=True)
    zc = z - m
    var = jnp.mean(zc * zc, axis=-1, keepdims=True)
    zn = zc * lax.rsqrt(var + eps)
    o_ref[...] = (zn * g_ref[...] + b_ref[...]).astype(o_ref.dtype)


def pallas_ffn_ln(x2d, w1_t, b1, w2_t, b2, g, b, *, eps=1e-5, tile_m=256):
    M, E = x2d.shape
    FF = w1_t.shape[1]
    tm = M if M <= tile_m else tile_m
    row = lambda i: (i, 0)
    rep = lambda i: (0, 0)
    return pl.pallas_call(
        functools.partial(_ffn_ln_kernel, eps=eps),
        out_shape=jax.ShapeDtypeStruct((M, E), x2d.dtype),
        grid=(pl.cdiv(M, tm),),
        in_specs=[
            pl.BlockSpec((tm, E), row),
            pl.BlockSpec((E, FF), rep),
            pl.BlockSpec((1, FF), rep),
            pl.BlockSpec((FF, E), rep),
            pl.BlockSpec((1, E), rep),
            pl.BlockSpec((1, E), rep),
            pl.BlockSpec((1, E), rep),
        ],
        out_specs=pl.BlockSpec((tm, E), row),
        compiler_params=_compiler_params(1),
    )(x2d, w1_t, b1, w2_t, b2, g, b)


# ---------------------------------------------------------------------------
# Encoder layer forward (src/pos: (S, N, E), PyTorch seq-first layout)
# ---------------------------------------------------------------------------
def transformer_encoder_layer(src, pos, params, nhead):
    S, N, E = src.shape
    # Go batch-first so each batch's sequence is one contiguous lane-dense
    # (S, E) slab — no per-head split/merge transposes between pallas_calls.
    src_b = jnp.transpose(src, (1, 0, 2))      # (N, S, E)
    pos_b = jnp.transpose(pos, (1, 0, 2))
    M = N * S
    src2d = src_b.reshape(M, E)
    pos2d = pos_b.reshape(M, E)

    # fused QKV projection
    q, k, v = pallas_qkv_proj(src2d, pos2d, params["wqk_t"], params["bqk"],
                              params["wv_t"], params["bv"])
    q3 = q.reshape(N, S, E)
    k3 = k.reshape(N, S, E)
    v3 = v.reshape(N, S, E)

    # attention + out-proj + residual + LayerNorm1
    x1 = pallas_attention_block(q3, k3, v3, src_b,
                                params["wo_t"], params["bo"],
                                params["ln1_g"], params["ln1_b"], nhead=nhead)

    # FFN + residual + LayerNorm2
    out2d = pallas_ffn_ln(x1.reshape(M, E),
                          params["w1_t"], params["b1"],
                          params["w2_t"], params["b2"],
                          params["ln2_g"], params["ln2_b"])
    return jnp.transpose(out2d.reshape(N, S, E), (1, 0, 2))


# ---------------------------------------------------------------------------
# pure-JAX reference (PyTorch semantics, eval mode)
# ---------------------------------------------------------------------------
def reference(src, pos, raw, nhead):
    S, N, E = src.shape
    H = nhead
    D = E // H
    qp = src + pos
    in_w, in_b = raw["in_proj_w"], raw["in_proj_b"]
    q = qp @ in_w[:E].T + in_b[:E]
    k = qp @ in_w[E:2 * E].T + in_b[E:2 * E]
    v = src @ in_w[2 * E:].T + in_b[2 * E:]

    def split(x):
        return x.reshape(S, N, H, D).transpose(1, 2, 0, 3)  # (N,H,S,D)

    qh, kh, vh = split(q), split(k), split(v)
    s = jnp.einsum("nhsd,nhtd->nhst", qh, kh) / math.sqrt(D)
    p = jax.nn.softmax(s, axis=-1)
    o = jnp.einsum("nhst,nhtd->nhsd", p, vh)
    o = o.transpose(2, 0, 1, 3).reshape(S, N, E)
    attn = o @ raw["out_proj_w"].T + raw["out_proj_b"]

    def ln(x, g, b):
        m = x.mean(-1, keepdims=True)
        var = ((x - m) ** 2).mean(-1, keepdims=True)
        return (x - m) / jnp.sqrt(var + 1e-5) * g + b

    x = ln(src + attn, raw["ln1_g"], raw["ln1_b"])
    ff = jnp.maximum(x @ raw["lin1_w"].T + raw["lin1_b"], 0.0)
    ff = ff @ raw["lin2_w"].T + raw["lin2_b"]
    return ln(x + ff, raw["ln2_g"], raw["ln2_b"])


# ---------------------------------------------------------------------------
if __name__ == "__main__":
    # Small but lane-aligned demo shapes (E, FF multiples of 128).
    S, N, E = 8, 4, 128
    NHEAD = 4
    FF = 256
    dtype = jnp.float32

    key = jax.random.PRNGKey(0)
    ks = jax.random.split(key, 16)

    def rnd(k, shape, scale=0.05):
        return jax.random.normal(k, shape, dtype) * scale

    in_proj_w = rnd(ks[0], (3 * E, E))
    in_proj_b = rnd(ks[1], (3 * E,))
    out_proj_w = rnd(ks[2], (E, E))
    out_proj_b = rnd(ks[3], (E,))
    lin1_w = rnd(ks[4], (FF, E))
    lin1_b = rnd(ks[5], (FF,))
    lin2_w = rnd(ks[6], (E, FF))
    lin2_b = rnd(ks[7], (E,))
    ln1_g = jnp.ones((E,), dtype) + rnd(ks[8], (E,))
    ln1_b = rnd(ks[9], (E,))
    ln2_g = jnp.ones((E,), dtype) + rnd(ks[10], (E,))
    ln2_b = rnd(ks[11], (E,))

    raw = dict(in_proj_w=in_proj_w, in_proj_b=in_proj_b,
               out_proj_w=out_proj_w, out_proj_b=out_proj_b,
               lin1_w=lin1_w, lin1_b=lin1_b, lin2_w=lin2_w, lin2_b=lin2_b,
               ln1_g=ln1_g, ln1_b=ln1_b, ln2_g=ln2_g, ln2_b=ln2_b)

    params = {
        # q and k projections fused into one (E, 2E) weight; all weights
        # pre-transposed to (in, out); biases / LN params as (1, out) rows.
        "wqk_t": jnp.concatenate([in_proj_w[:E].T, in_proj_w[E:2 * E].T], axis=1),
        "bqk":   in_proj_b[:2 * E][None, :],
        "wv_t":  in_proj_w[2 * E:].T, "bv": in_proj_b[2 * E:][None, :],
        "wo_t":  out_proj_w.T,        "bo": out_proj_b[None, :],
        "w1_t":  lin1_w.T,            "b1": lin1_b[None, :],
        "w2_t":  lin2_w.T,            "b2": lin2_b[None, :],
        "ln1_g": ln1_g[None, :],      "ln1_b": ln1_b[None, :],
        "ln2_g": ln2_g[None, :],      "ln2_b": ln2_b[None, :],
    }

    src = jax.random.normal(ks[12], (S, N, E), dtype)
    pos = jax.random.normal(ks[13], (S, N, E), dtype)

    # TODO(synk): dropout (train-mode stochastic masking) and
    # attn_mask / key_padding_mask are not implemented; this matches the
    # module in eval() mode with both masks = None.

    out = transformer_encoder_layer(src, pos, params, NHEAD)
    out = jax.block_until_ready(out)

    ref = reference(src, pos, raw, NHEAD)
    assert out.shape == (S, N, E)
    max_err = float(jnp.max(jnp.abs(out - ref)))
    assert jnp.allclose(out, ref, atol=1e-4, rtol=1e-4), max_err

    print("KERNEL_OK")
</pallas_src>

<mosaic_0001>
module attributes {stable_mosaic.version = 11 : i64} {
  func.func @_qkv_proj_kernel(%arg0: i32, %arg1: memref<32x128xf32, #tpu.memory_space<vmem>>, %arg2: memref<32x128xf32, #tpu.memory_space<vmem>>, %arg3: memref<128x256xf32, #tpu.memory_space<vmem>>, %arg4: memref<1x256xf32, #tpu.memory_space<vmem>>, %arg5: memref<128x128xf32, #tpu.memory_space<vmem>>, %arg6: memref<1x128xf32, #tpu.memory_space<vmem>>, %arg7: memref<32x128xf32, #tpu.memory_space<vmem>>, %arg8: memref<32x128xf32, #tpu.memory_space<vmem>>, %arg9: memref<32x128xf32, #tpu.memory_space<vmem>>) attributes {dimension_semantics = [#tpu.dimension_semantics<parallel>], iteration_bounds = array<i64: 1>, scalar_prefetch = 0 : i64, scratch_operands = 0 : i64, tpu.core_type = #tpu.core_type<tc>, window_params = [{transform_indices = @transform_0, window_bounds = array<i64: 32, 128>}, {transform_indices = @transform_1, window_bounds = array<i64: 32, 128>}, {pipeline_mode = #tpu.pipeline_mode<synchronous>, transform_indices = @transform_2, window_bounds = array<i64: 128, 256>}, {pipeline_mode = #tpu.pipeline_mode<synchronous>, transform_indices = @transform_3, window_bounds = array<i64: 1, 256>}, {pipeline_mode = #tpu.pipeline_mode<synchronous>, transform_indices = @transform_4, window_bounds = array<i64: 128, 128>}, {pipeline_mode = #tpu.pipeline_mode<synchronous>, transform_indices = @transform_5, window_bounds = array<i64: 1, 128>}, {transform_indices = @transform_6, window_bounds = array<i64: 32, 128>}, {transform_indices = @transform_7, window_bounds = array<i64: 32, 128>}, {transform_indices = @transform_8, window_bounds = array<i64: 32, 128>}]} {
    %c0 = arith.constant 0 : index
    %c0_0 = arith.constant 0 : index
    %0 = vector.load %arg1[%c0, %c0_0] : memref<32x128xf32, #tpu.memory_space<vmem>>, vector<32x128xf32>
    %c0_1 = arith.constant 0 : index
    %c0_2 = arith.constant 0 : index
    %1 = vector.load %arg2[%c0_1, %c0_2] : memref<32x128xf32, #tpu.memory_space<vmem>>, vector<32x128xf32>
    %2 = arith.addf %0, %1 : vector<32x128xf32>
    %c0_3 = arith.constant 0 : index
    %c0_4 = arith.constant 0 : index
    %3 = vector.load %arg3[%c0_3, %c0_4] : memref<128x256xf32, #tpu.memory_space<vmem>>, vector<128x256xf32>
    %cst = arith.constant dense<0.000000e+00> : vector<32x256xf32>
    %4 = tpu.matmul %2, %3, %cst {dimension_numbers = #tpu.dot_dimension_numbers<[1], [0], [0], [1], [0, 0, 1, 1], [], []>} : vector<32x128xf32>, vector<128x256xf32>, vector<32x256xf32> -> vector<32x256xf32>
    %c0_5 = arith.constant 0 : index
    %c0_6 = arith.constant 0 : index
    %5 = vector.load %arg4[%c0_5, %c0_6] : memref<1x256xf32, #tpu.memory_space<vmem>>, vector<1x256xf32>
    %6 = vector.broadcast %5 : vector<1x256xf32> to vector<32x256xf32>
    %7 = arith.addf %4, %6 : vector<32x256xf32>
    %8 = vector.extract_strided_slice %7 {offsets = [0, 0], sizes = [32, 128], strides = [1, 1]} : vector<32x256xf32> to vector<32x128xf32>
    %c0_7 = arith.constant 0 : index
    %c0_8 = arith.constant 0 : index
    %9 = vector.load %arg7[%c0_7, %c0_8] : memref<32x128xf32, #tpu.memory_space<vmem>>, vector<32x128xf32>
    tpu.vector_store %arg7[%c0_7, %c0_8], %8 {strides = array<i32>} : memref<32x128xf32, #tpu.memory_space<vmem>>, vector<32x128xf32>,
    %10 = vector.extract_strided_slice %7 {offsets = [0, 128], sizes = [32, 128], strides = [1, 1]} : vector<32x256xf32> to vector<32x128xf32>
    %c0_9 = arith.constant 0 : index
    %c0_10 = arith.constant 0 : index
    %11 = vector.load %arg8[%c0_9, %c0_10] : memref<32x128xf32, #tpu.memory_space<vmem>>, vector<32x128xf32>
    tpu.vector_store %arg8[%c0_9, %c0_10], %10 {strides = array<i32>} : memref<32x128xf32, #tpu.memory_space<vmem>>, vector<32x128xf32>,
    %c0_11 = arith.constant 0 : index
    %c0_12 = arith.constant 0 : index
    %12 = vector.load %arg5[%c0_11, %c0_12] : memref<128x128xf32, #tpu.memory_space<vmem>>, vector<128x128xf32>
    %cst_13 = arith.constant dense<0.000000e+00> : vector<32x128xf32>
    %13 = tpu.matmul %0, %12, %cst_13 {dimension_numbers = #tpu.dot_dimension_numbers<[1], [0], [0], [1], [0, 0, 1, 1], [], []>} : vector<32x128xf32>, vector<128x128xf32>, vector<32x128xf32> -> vector<32x128xf32>
    %c0_14 = arith.constant 0 : index
    %c0_15 = arith.constant 0 : index
    %14 = vector.load %arg6[%c0_14, %c0_15] : memref<1x128xf32, #tpu.memory_space<vmem>>, vector<1x128xf32>
    %15 = vector.broadcast %14 : vector<1x128xf32> to vector<32x128xf32>
    %16 = arith.addf %13, %15 : vector<32x128xf32>
    %c0_16 = arith.constant 0 : index
    %c0_17 = arith.constant 0 : index
    %17 = vector.load %arg9[%c0_16, %c0_17] : memref<32x128xf32, #tpu.memory_space<vmem>>, vector<32x128xf32>
    tpu.vector_store %arg9[%c0_16, %c0_17], %16 {strides = array<i32>} : memref<32x128xf32, #tpu.memory_space<vmem>>, vector<32x128xf32>,
    return
  }
  func.func @transform_0(%arg0: i32) -> (i32, i32) {
    %c0_i32 = arith.constant 0 : i32
    %c0_i32_0 = arith.constant 0 : i32
    return %arg0, %c0_i32 : i32, i32
  }
  func.func @transform_1(%arg0: i32) -> (i32, i32) {
    %c0_i32 = arith.constant 0 : i32
    %c0_i32_0 = arith.constant 0 : i32
    return %arg0, %c0_i32 : i32, i32
  }
  func.func @transform_2(%arg0: i32) -> (i32, i32) {
    %c0_i32 = arith.constant 0 : i32
    %c0_i32_0 = arith.constant 0 : i32
    %c0_i32_1 = arith.constant 0 : i32
    return %c0_i32, %c0_i32_0 : i32, i32
  }
  func.func @transform_3(%arg0: i32) -> (i32, i32) {
    %c0_i32 = arith.constant 0 : i32
    %c0_i32_0 = arith.constant 0 : i32
    %c0_i32_1 = arith.constant 0 : i32
    return %c0_i32, %c0_i32_0 : i32, i32
  }
  func.func @transform_4(%arg0: i32) -> (i32, i32) {
    %c0_i32 = arith.constant 0 : i32
    %c0_i32_0 = arith.constant 0 : i32
    %c0_i32_1 = arith.constant 0 : i32
    return %c0_i32, %c0_i32_0 : i32, i32
  }
  func.func @transform_5(%arg0: i32) -> (i32, i32) {
    %c0_i32 = arith.constant 0 : i32
    %c0_i32_0 = arith.constant 0 : i32
    %c0_i32_1 = arith.constant 0 : i32
    return %c0_i32, %c0_i32_0 : i32, i32
  }
  func.func @transform_6(%arg0: i32) -> (i32, i32) {
    %c0_i32 = arith.constant 0 : i32
    %c0_i32_0 = arith.constant 0 : i32
    return %arg0, %c0_i32 : i32, i32
  }
  func.func @transform_7(%arg0: i32) -> (i32, i32) {
    %c0_i32 = arith.constant 0 : i32
    %c0_i32_0 = arith.constant 0 : i32
    return %arg0, %c0_i32 : i32, i32
  }
  func.func @transform_8(%arg0: i32) -> (i32, i32) {
    %c0_i32 = arith.constant 0 : i32
    %c0_i32_0 = arith.constant 0 : i32
    return %arg0, %c0_i32 : i32, i32
  }
}

</mosaic_0001>

<llo_original>
// kernel: tpu_custom_call.1
$region0: #{tpu_custom_call.1}
  #allocation0 [shape = 'u32[]', space=smem, size = 0x4, offset = 0x4, fixed_abs, tag = 'smem constant byte address 0x4 - core index']
  #allocation1 [shape = 'u32[144,128]{1,0:T(1,128)}', space=vmem, size = 0x12000, scoped, tag = 'internal scratch']
  %s0 = inlined_call_operand.hbm [shape: f32[32,128], index: 0, kind: input, shape index: {}]
  %s1 = inlined_call_operand.hbm [shape: f32[32,128], index: 1, kind: input, shape index: {}]
  %s2 = inlined_call_operand.hbm [shape: f32[128,256], index: 2, kind: input, shape index: {}]
  %s3 = inlined_call_operand.vmem [shape: f32[1,256], index: 3, kind: input, shape index: {}]
  %s4 = inlined_call_operand.hbm [shape: f32[128,128], index: 4, kind: input, shape index: {}]
  %s5 = inlined_call_operand.vmem [shape: f32[1,128], index: 5, kind: input, shape index: {}]
  %s6 = inlined_call_operand.hbm [shape: f32[32,128], index: 6, kind: output, shape index: {0}]
  %s7 = inlined_call_operand.hbm [shape: f32[32,128], index: 7, kind: output, shape index: {1}]
  %s8 = inlined_call_operand.hbm [shape: f32[32,128], index: 8, kind: output, shape index: {2}]
  %9 = xla_tuple %s6, %s7, %s8
  %s10 = sld [smem:[#allocation0]]
  $region66: #{tpu_custom_call.1} parent=0
    _
  %s12 = ssub.s32 1, %s10
  %s13 = scalar_select 0, %s12, %s10
  $region1: #{tpu_custom_call.1} parent=0
    #allocation2 [shape = 'u8[16384]{0}', space=vmem, size = 0x4000, scoped, tag = 'input window, operand 0, single buffered']
    #allocation3 [shape = 's32[1]{0}', space=sflag, size = 0x4, scoped, tag = 'scoped memory for tpu_custom_call.1']
    #allocation4 [shape = 's32[1]{0}', space=sflag, size = 0x4, scoped, tag = 'scoped memory for tpu_custom_call.1']
    #allocation5 [shape = 'u8[16384]{0}', space=vmem, size = 0x4000, scoped, tag = 'input window, operand 1, single buffered']
    #allocation6 [shape = 's32[1]{0}', space=sflag, size = 0x4, scoped, tag = 'scoped memory for tpu_custom_call.1']
    #allocation7 [shape = 'u8[131072]{0}', space=vmem, size = 0x20000, scoped, tag = 'input window, operand 2, single buffered']
    #allocation8 [shape = 'u8[65536]{0}', space=vmem, size = 0x10000, scoped, tag = 'input window, operand 4, single buffered']
    #allocation9 [shape = 's32[1]{0}', space=sflag, size = 0x4, scoped, tag = 'scoped memory for tpu_custom_call.1']
    #allocation10 [shape = 'u8[16384]{0}', space=vmem, size = 0x4000, scoped, tag = 'output window, operand 0, single buffered']
    #allocation11 [shape = 'u8[16384]{0}', space=vmem, size = 0x4000, scoped, tag = 'output window, operand 1, single buffered']
    #allocation12 [shape = 's32[1]{0}', space=sflag, size = 0x4, scoped, tag = 'scoped memory for tpu_custom_call.1']
    #allocation13 [shape = 'u8[16384]{0}', space=vmem, size = 0x4000, scoped, tag = 'output window, operand 2, single buffered']
    %14 = vsyncpa [#allocation3], 0
    %15 = vsyncpa [#allocation6], 0
    %16 = vsyncpa [#allocation9], 0
    %17 = vsyncpa [#allocation4], 0
    %18 = vsyncpa [#allocation12], 0
    // Predicated region
    $region2: #{tpu_custom_call.1} parent=1 // pred_check
      _
    $region3: #{tpu_custom_call.1} parent=1 // pred_check_branch
      %20 = sbr.rel (0) target = $region5
    $region4: #{tpu_custom_call.1} parent=1 // pred_region
      %s22 = ssub.s32 512, 512
      %23 = vsyncadd [#allocation3], %s22
      %s24 = sshll.u32 [#allocation2], 4
      %s25 = int_to_ptr.vmem [resolvable:$true] %s24
      %30 = dma.hbm_to_vmem [thread:$0]  %s0, 512, %s25, [#allocation3], 128, 128, 8
    $region5: #{tpu_custom_call.1} parent=1 // pred_fallthru
      _
    // Predicated region
    $region6: #{tpu_custom_call.1} parent=1 // pred_check
      _
    $region7: #{tpu_custom_call.1} parent=1 // pred_check_branch
      %32 = sbr.rel (0) target = $region9
    $region8: #{tpu_custom_call.1} parent=1 // pred_region
      %s34 = ssub.s32 512, 512
      %35 = vsyncadd [#allocation6], %s34
      %s36 = sshll.u32 [#allocation5], 4
      %s37 = int_to_ptr.vmem [resolvable:$true] %s36
      %42 = dma.hbm_to_vmem [thread:$0]  %s1, 512, %s37, [#allocation6], 128, 128, 8
    $region9: #{tpu_custom_call.1} parent=1 // pred_fallthru
      _
    // Predicated region
    $region10: #{tpu_custom_call.1} parent=1 // pred_check
      _
    $region11: #{tpu_custom_call.1} parent=1 // pred_check_branch
      %44 = sbr.rel (0) target = $region13
    $region12: #{tpu_custom_call.1} parent=1 // pred_region
      %s46 = ssub.s32 4096, 4096
      %47 = vsyncadd [#allocation6], %s46
      %s48 = sshll.u32 [#allocation7], 4
      %s49 = int_to_ptr.vmem [resolvable:$true] %s48
      %54 = dma.hbm_to_vmem [thread:$0]  %s2, 4096, %s49, [#allocation6], 256, 256, 16
    $region13: #{tpu_custom_call.1} parent=1 // pred_fallthru
      _
    // Predicated region
    $region14: #{tpu_custom_call.1} parent=1 // pred_check
      _
    $region15: #{tpu_custom_call.1} parent=1 // pred_check_branch
      %56 = sbr.rel (0) target = $region17
    $region16: #{tpu_custom_call.1} parent=1 // pred_region
      _
    $region17: #{tpu_custom_call.1} parent=1 // pred_fallthru
      _
    // Predicated region
    $region18: #{tpu_custom_call.1} parent=1 // pred_check
      _
    $region19: #{tpu_custom_call.1} parent=1 // pred_check_branch
      %58 = sbr.rel (0) target = $region21
    $region20: #{tpu_custom_call.1} parent=1 // pred_region
      %s60 = ssub.s32 2048, 2048
      %61 = vsyncadd [#allocation9], %s60
      %s62 = sshll.u32 [#allocation8], 4
      %s63 = int_to_ptr.vmem [resolvable:$true] %s62
      %68 = dma.hbm_to_vmem [thread:$0]  %s4, 2048, %s63, [#allocation9], 128, 128, 8
    $region21: #{tpu_custom_call.1} parent=1 // pred_fallthru
      _
    // Predicated region
    $region22: #{tpu_custom_call.1} parent=1 // pred_check
      _
    $region23: #{tpu_custom_call.1} parent=1 // pred_check_branch
      %70 = sbr.rel (0) target = $region25
    $region24: #{tpu_custom_call.1} parent=1 // pred_region
      _
    $region25: #{tpu_custom_call.1} parent=1 // pred_fallthru
      _
    // Predicated region
    $region26: #{tpu_custom_call.1} parent=1 // pred_check
      _
    $region27: #{tpu_custom_call.1} parent=1 // pred_check_branch
      %72 = sbr.rel (0) target = $region29
    $region28: #{tpu_custom_call.1} parent=1 // pred_region
      %73 = dma.done [#allocation3], 512
    $region29: #{tpu_custom_call.1} parent=1 // pred_fallthru
      _
    // Predicated region
    $region30: #{tpu_custom_call.1} parent=1 // pred_check
      _
    $region31: #{tpu_custom_call.1} parent=1 // pred_check_branch
      %75 = sbr.rel (0) target = $region33
    $region32: #{tpu_custom_call.1} parent=1 // pred_region
      %76 = dma.done [#allocation6], 512
    $region33: #{tpu_custom_call.1} parent=1 // pred_fallthru
      _
    // Predicated region
    $region34: #{tpu_custom_call.1} parent=1 // pred_check
      _
    $region35: #{tpu_custom_call.1} parent=1 // pred_check_branch
      %78 = sbr.rel (0) target = $region37
    $region36: #{tpu_custom_call.1} parent=1 // pred_region
      %79 = dma.done [#allocation6], 4096
    $region37: #{tpu_custom_call.1} parent=1 // pred_fallthru
      _
    // Predicated region
    $region38: #{tpu_custom_call.1} parent=1 // pred_check
      _
    $region39: #{tpu_custom_call.1} parent=1 // pred_check_branch
      %81 = sbr.rel (0) target = $region41
    $region40: #{tpu_custom_call.1} parent=1 // pred_region
      %82 = dma.done [#allocation9], 2048
    $region41: #{tpu_custom_call.1} parent=1 // pred_fallthru
      _
    %v83 = vld [vmem:[#allocation2] sm:$0xff]
    %v84 = vld [vmem:[#allocation2 + $0x8] sm:$0xff]
    %v85 = vld [vmem:[#allocation2 + $0x10] sm:$0xff]
    %v86 = vld [vmem:[#allocation2 + $0x18] sm:$0xff]
    %v87 = vld [vmem:[#allocation5] sm:$0xff]
    %v88 = vld [vmem:[#allocation5 + $0x8] sm:$0xff]
    %v89 = vld [vmem:[#allocation5 + $0x10] sm:$0xff]
    %v90 = vld [vmem:[#allocation5 + $0x18] sm:$0xff]
    %v91 = vadd.f32 %v83, %v87
    %v92 = vadd.f32 %v84, %v88
    %v93 = vadd.f32 %v85, %v89
    %v94 = vadd.f32 %v86, %v90
    %v95 = vld [vmem:[#allocation7] sm:$0xff]
    %v96 = vld [vmem:[#allocation7 + $0x8] sm:$0xff]
    %v97 = vld [vmem:[#allocation7 + $0x10] sm:$0xff]
    %v98 = vld [vmem:[#allocation7 + $0x18] sm:$0xff]
    %v99 = vld [vmem:[#allocation7 + $0x20] sm:$0xff]
    %v100 = vld [vmem:[#allocation7 + $0x28] sm:$0xff]
    %v101 = vld [vmem:[#allocation7 + $0x30] sm:$0xff]
    %v102 = vld [vmem:[#allocation7 + $0x38] sm:$0xff]
    %v103 = vld [vmem:[#allocation7 + $0x40] sm:$0xff]
    %v104 = vld [vmem:[#allocation7 + $0x48] sm:$0xff]
    %v105 = vld [vmem:[#allocation7 + $0x50] sm:$0xff]
    %v106 = vld [vmem:[#allocation7 + $0x58] sm:$0xff]
    %v107 = vld [vmem:[#allocation7 + $0x60] sm:$0xff]
    %v108 = vld [vmem:[#allocation7 + $0x68] sm:$0xff]
    %v109 = vld [vmem:[#allocation7 + $0x70] sm:$0xff]
    %v110 = vld [vmem:[#allocation7 + $0x78] sm:$0xff]
    %v111 = vld [vmem:[#allocation7 + $0x80] sm:$0xff]
    %v112 = vld [vmem:[#allocation7 + $0x88] sm:$0xff]
    %v113 = vld [vmem:[#allocation7 + $0x90] sm:$0xff]
    %v114 = vld [vmem:[#allocation7 + $0x98] sm:$0xff]
    %v115 = vld [vmem:[#allocation7 + $0xa0] sm:$0xff]
    %v116 = vld [vmem:[#allocation7 + $0xa8] sm:$0xff]
    %v117 = vld [vmem:[#allocation7 + $0xb0] sm:$0xff]
    %v118 = vld [vmem:[#allocation7 + $0xb8] sm:$0xff]
    %v119 = vld [vmem:[#allocation7 + $0xc0] sm:$0xff]
    %v120 = vld [vmem:[#allocation7 + $0xc8] sm:$0xff]
    %v121 = vld [vmem:[#allocation7 + $0xd0] sm:$0xff]
    %v122 = vld [vmem:[#allocation7 + $0xd8] sm:$0xff]
    %v123 = vld [vmem:[#allocation7 + $0xe0] sm:$0xff]
    %v124 = vld [vmem:[#allocation7 + $0xe8] sm:$0xff]
    %v125 = vld [vmem:[#allocation7 + $0xf0] sm:$0xff]
    %v126 = vld [vmem:[#allocation7 + $0xf8] sm:$0xff]
    %v127 = vld [vmem:[%s3] sm:$0x3]
    %v129 = vlaneseq
    %v130 = vshrl.u32 %v129, 7
    %v131 = vsub.s32 0, %v130
    %v132 = vrot.slane %v127, %v131
    %v133 = vlaneseq
    %v134 = vshrl.u32 %v133, 7
    %v135 = vsub.s32 1, %v134
    %v136 = vrot.slane %v127, %v135
    %139 = vmatprep.subr.mxu0 %v126
    %140 = vmatpush1.msra.mxu0 %v125
    %141 = vmatprep.subr.mxu0 %v124
    %142 = vmatpush1.msra.mxu0 %v123
    %143 = vmatprep.subr.mxu0 %v122
    %144 = vmatpush1.msra.mxu0 %v121
    %145 = vmatprep.subr.mxu0 %v120
    %146 = vmatpush1.msra.mxu0 %v119
    %147 = vmatprep.subr.mxu0 %v118
    %148 = vmatpush1.msra.mxu0 %v117
    %149 = vmatprep.subr.mxu0 %v116
    %150 = vmatpush1.msra.mxu0 %v115
    %151 = vmatprep.subr.mxu0 %v114
    %152 = vmatpush1.msra.mxu0 %v113
    %153 = vmatprep.subr.mxu0 %v112
    %154 = vmatpush1.msra.mxu0 %v111
    %155 = vmatprep.subr.mxu0 %v110
    %156 = vmatpush1.msra.mxu0 %v109
    %157 = vmatprep.subr.mxu0 %v108
    %158 = vmatpush1.msra.mxu0 %v107
    %159 = vmatprep.subr.mxu0 %v106
    %160 = vmatpush1.msra.mxu0 %v105
    %161 = vmatprep.subr.mxu0 %v104
    %162 = vmatpush1.msra.mxu0 %v103
    %163 = vmatprep.subr.mxu0 %v102
    %164 = vmatpush1.msra.mxu0 %v101
    %165 = vmatprep.subr.mxu0 %v100
    %166 = vmatpush1.msra.mxu0 %v99
    %167 = vmatprep.subr.mxu0 %v98
    %168 = vmatpush1.msra.mxu0 %v97
    %169 = vmatprep.subr.mxu0 %v96
    %170 = vmatpush1.msra.mxu0 %v95
    %171 = vmatprep.subr.mxu0 0.0
    %172 = vmatpush2.msra.mxu0 0.0
    %173 = vmatprep.subr.mxu0 0.0
    %174 = vmatpush2.msra.mxu0 0.0
    %175 = vmatprep.subr.mxu0 0.0
    %176 = vmatpush2.msra.mxu0 0.0
    %177 = vmatprep.subr.mxu0 0.0
    %178 = vmatpush2.msra.mxu0 0.0
    %179 = vmatprep.subr.mxu0 0.0
    %180 = vmatpush2.msra.mxu0 0.0
    %181 = vmatprep.subr.mxu0 0.0
    %182 = vmatpush2.msra.mxu0 0.0
    %183 = vmatprep.subr.mxu0 0.0
    %184 = vmatpush2.msra.mxu0 0.0
    %185 = vmatprep.subr.mxu0 0.0
    %186 = vmatpush2.msra.mxu0 0.0
    %187 = vmatprep.subr.mxu0 0.0
    %188 = vmatpush2.msra.mxu0 0.0
    %189 = vmatprep.subr.mxu0 0.0
    %190 = vmatpush2.msra.mxu0 0.0
    %191 = vmatprep.subr.mxu0 0.0
    %192 = vmatpush2.msra.mxu0 0.0
    %193 = vmatprep.subr.mxu0 0.0
    %194 = vmatpush2.msra.mxu0 0.0
    %195 = vmatprep.subr.mxu0 0.0
    %196 = vmatpush2.msra.mxu0 0.0
    %197 = vmatprep.subr.mxu0 0.0
    %198 = vmatpush2.msra.mxu0 0.0
    %199 = vmatprep.subr.mxu0 0.0
    %200 = vmatpush2.msra.mxu0 0.0
    %201 = vmatprep.subr.mxu0 0.0
    %202 = vmatpush2.msra.mxu0 0.0
    %203 = vmatprep.mubr.f32.mxu0 0.0
    %204 = vmatmul.mubr.f32.gmra.mxu0 %v91
    %v205 = vpop.f32.mrf.mxu0
    %v206 = vadd.f32 %v132, %v205
    %v207 = vpop.f32.mrf.mxu0
    %v208 = vadd.f32 %v136, %v207
    %209 = vmatprep.mubr.f32.mxu0 0.0
    %210 = vmatmul.mubr.f32.gmra.mxu0 %v92
    %v211 = vpop.f32.mrf.mxu0
    %v212 = vadd.f32 %v132, %v211
    %v213 = vpop.f32.mrf.mxu0
    %v214 = vadd.f32 %v136, %v213
    %215 = vmatprep.mubr.f32.mxu0 0.0
    %216 = vmatmul.mubr.f32.gmra.mxu0 %v93
    %v217 = vpop.f32.mrf.mxu0
    %v218 = vadd.f32 %v132, %v217
    %v219 = vpop.f32.mrf.mxu0
    %v220 = vadd.f32 %v136, %v219
    %221 = vmatprep.mubr.f32.mxu0 0.0
    %222 = vmatmul.mubr.f32.gmra.mxu0 %v94
    %v223 = vpop.f32.mrf.mxu0
    %v224 = vadd.f32 %v132, %v223
    %v225 = vpop.f32.mrf.mxu0
    %v226 = vadd.f32 %v136, %v225
    %227 = vdwg.mxu0
    %228 = vst [vmem:[#allocation10] sm:$0xff] %v206
    %229 = vst [vmem:[#allocation10 + $0x8] sm:$0xff] %v212
    %230 = vst [vmem:[#allocation10 + $0x10] sm:$0xff] %v218
    %231 = vst [vmem:[#allocation10 + $0x18] sm:$0xff] %v224
    %232 = vst [vmem:[#allocation11] sm:$0xff] %v208
    %233 = vst [vmem:[#allocation11 + $0x8] sm:$0xff] %v214
    %234 = vst [vmem:[#allocation11 + $0x10] sm:$0xff] %v220
    %235 = vst [vmem:[#allocation11 + $0x18] sm:$0xff] %v226
    %v236 = vld [vmem:[#allocation8] sm:$0xff]
    %v237 = vld [vmem:[#allocation8 + $0x8] sm:$0xff]
    %v238 = vld [vmem:[#allocation8 + $0x10] sm:$0xff]
    %v239 = vld [vmem:[#allocation8 + $0x18] sm:$0xff]
    %v240 = vld [vmem:[#allocation8 + $0x20] sm:$0xff]
    %v241 = vld [vmem:[#allocation8 + $0x28] sm:$0xff]
    %v242 = vld [vmem:[#allocation8 + $0x30] sm:$0xff]
    %v243 = vld [vmem:[#allocation8 + $0x38] sm:$0xff]
    %v244 = vld [vmem:[#allocation8 + $0x40] sm:$0xff]
    %v245 = vld [vmem:[#allocation8 + $0x48] sm:$0xff]
    %v246 = vld [vmem:[#allocation8 + $0x50] sm:$0xff]
    %v247 = vld [vmem:[#allocation8 + $0x58] sm:$0xff]
    %v248 = vld [vmem:[#allocation8 + $0x60] sm:$0xff]
    %v249 = vld [vmem:[#allocation8 + $0x68] sm:$0xff]
    %v250 = vld [vmem:[#allocation8 + $0x70] sm:$0xff]
    %v251 = vld [vmem:[#allocation8 + $0x78] sm:$0xff]
    %v252 = vld [vmem:[%s5] sm:$0x1]
    %v254 = vlaneseq
    %v255 = vshrl.u32 %v254, 7
    %v256 = vsub.s32 0, %v255
    %v257 = vrot.slane %v252, %v256
    %259 = vmatprep.subr.mxu0 0.0
    %260 = vmatpush1.msra.mxu0 %v251
    %261 = vmatprep.subr.mxu0 0.0
    %262 = vmatpush1.msra.mxu0 %v250
    %263 = vmatprep.subr.mxu0 0.0
    %264 = vmatpush1.msra.mxu0 %v249
    %265 = vmatprep.subr.mxu0 0.0
    %266 = vmatpush1.msra.mxu0 %v248
    %267 = vmatprep.subr.mxu0 0.0
    %268 = vmatpush1.msra.mxu0 %v247
    %269 = vmatprep.subr.mxu0 0.0
    %270 = vmatpush1.msra.mxu0 %v246
    %271 = vmatprep.subr.mxu0 0.0
    %272 = vmatpush1.msra.mxu0 %v245
    %273 = vmatprep.subr.mxu0 0.0
    %274 = vmatpush1.msra.mxu0 %v244
    %275 = vmatprep.subr.mxu0 0.0
    %276 = vmatpush1.msra.mxu0 %v243
    %277 = vmatprep.subr.mxu0 0.0
    %278 = vmatpush1.msra.mxu0 %v242
    %279 = vmatprep.subr.mxu0 0.0
    %280 = vmatpush1.msra.mxu0 %v241
    %281 = vmatprep.subr.mxu0 0.0
    %282 = vmatpush1.msra.mxu0 %v240
    %283 = vmatprep.subr.mxu0 0.0
    %284 = vmatpush1.msra.mxu0 %v239
    %285 = vmatprep.subr.mxu0 0.0
    %286 = vmatpush1.msra.mxu0 %v238
    %287 = vmatprep.subr.mxu0 0.0
    %288 = vmatpush1.msra.mxu0 %v237
    %289 = vmatprep.subr.mxu0 0.0
    %290 = vmatpush1.msra.mxu0 %v236
    %291 = vmatprep.subr.mxu0 0.0
    %292 = vmatpush2.msra.mxu0 0.0
    %293 = vmatprep.subr.mxu0 0.0
    %294 = vmatpush2.msra.mxu0 0.0
    %295 = vmatprep.subr.mxu0 0.0
    %296 = vmatpush2.msra.mxu0 0.0
    %297 = vmatprep.subr.mxu0 0.0
    %298 = vmatpush2.msra.mxu0 0.0
    %299 = vmatprep.subr.mxu0 0.0
    %300 = vmatpush2.msra.mxu0 0.0
    %301 = vmatprep.subr.mxu0 0.0
    %302 = vmatpush2.msra.mxu0 0.0
    %303 = vmatprep.subr.mxu0 0.0
    %304 = vmatpush2.msra.mxu0 0.0
    %305 = vmatprep.subr.mxu0 0.0
    %306 = vmatpush2.msra.mxu0 0.0
    %307 = vmatprep.subr.mxu0 0.0
    %308 = vmatpush2.msra.mxu0 0.0
    %309 = vmatprep.subr.mxu0 0.0
    %310 = vmatpush2.msra.mxu0 0.0
    %311 = vmatprep.subr.mxu0 0.0
    %312 = vmatpush2.msra.mxu0 0.0
    %313 = vmatprep.subr.mxu0 0.0
    %314 = vmatpush2.msra.mxu0 0.0
    %315 = vmatprep.subr.mxu0 0.0
    %316 = vmatpush2.msra.mxu0 0.0
    %317 = vmatprep.subr.mxu0 0.0
    %318 = vmatpush2.msra.mxu0 0.0
    %319 = vmatprep.subr.mxu0 0.0
    %320 = vmatpush2.msra.mxu0 0.0
    %321 = vmatprep.subr.mxu0 0.0
    %322 = vmatpush2.msra.mxu0 0.0
    %323 = vmatprep.mubr.f32.mxu0 0.0
    %324 = vmatmul.mubr.f32.gmra.mxu0 %v83
    %v325 = vpop.f32.mrf.mxu0
    %v326 = vadd.f32 %v257, %v325
    %v327 = vpop.f32.mrf.mxu0
    %328 = vmatprep.mubr.f32.mxu0 0.0
    %329 = vmatmul.mubr.f32.gmra.mxu0 %v84
    %v330 = vpop.f32.mrf.mxu0
    %v331 = vadd.f32 %v257, %v330
    %v332 = vpop.f32.mrf.mxu0
    %333 = vmatprep.mubr.f32.mxu0 0.0
    %334 = vmatmul.mubr.f32.gmra.mxu0 %v85
    %v335 = vpop.f32.mrf.mxu0
    %v336 = vadd.f32 %v257, %v335
    %v337 = vpop.f32.mrf.mxu0
    %338 = vmatprep.mubr.f32.mxu0 0.0
    %339 = vmatmul.mubr.f32.gmra.mxu0 %v86
    %v340 = vpop.f32.mrf.mxu0
    %v341 = vadd.f32 %v257, %v340
    %v342 = vpop.f32.mrf.mxu0
    %343 = vdwg.mxu0
    %344 = vst [vmem:[#allocation13] sm:$0xff] %v326
    %345 = vst [vmem:[#allocation13 + $0x8] sm:$0xff] %v331
    %346 = vst [vmem:[#allocation13 + $0x10] sm:$0xff] %v336
    %347 = vst [vmem:[#allocation13 + $0x18] sm:$0xff] %v341
    // Predicated region
    $region42: #{tpu_custom_call.1} parent=1 // pred_check
      _
    $region43: #{tpu_custom_call.1} parent=1 // pred_check_branch
      %349 = sbr.rel (0) target = $region45
    $region44: #{tpu_custom_call.1} parent=1 // pred_region
      %s351 = ssub.s32 512, 512
      %352 = vsyncadd [#allocation4], %s351
      %s353 = sshll.u32 [#allocation10], 4
      %s354 = int_to_ptr.vmem [resolvable:$true] %s353
      %359 = dma.vmem_to_hbm [thread:$0]  %s354, 512, %s6, [#allocation4], 128, 128, 8
    $region45: #{tpu_custom_call.1} parent=1 // pred_fallthru
      _
    // Predicated region
    $region46: #{tpu_custom_call.1} parent=1 // pred_check
      _
    $region47: #{tpu_custom_call.1} parent=1 // pred_check_branch
      %361 = sbr.rel (0) target = $region49
    $region48: #{tpu_custom_call.1} parent=1 // pred_region
      %s363 = ssub.s32 512, 512
      %364 = vsyncadd [#allocation12], %s363
      %s365 = sshll.u32 [#allocation11], 4
      %s366 = int_to_ptr.vmem [resolvable:$true] %s365
      %371 = dma.vmem_to_hbm [thread:$0]  %s366, 512, %s7, [#allocation12], 128, 128, 8
    $region49: #{tpu_custom_call.1} parent=1 // pred_fallthru
      _
    // Predicated region
    $region50: #{tpu_custom_call.1} parent=1 // pred_check
      _
    $region51: #{tpu_custom_call.1} parent=1 // pred_check_branch
      %373 = sbr.rel (0) target = $region53
    $region52: #{tpu_custom_call.1} parent=1 // pred_region
      %s375 = ssub.s32 512, 512
      %376 = vsyncadd [#allocation12], %s375
      %s377 = sshll.u32 [#allocation13], 4
      %s378 = int_to_ptr.vmem [resolvable:$true] %s377
      %383 = dma.vmem_to_hbm [thread:$0]  %s378, 512, %s8, [#allocation12], 128, 128, 8
    $region53: #{tpu_custom_call.1} parent=1 // pred_fallthru
      _
    // Predicated region
    $region54: #{tpu_custom_call.1} parent=1 // pred_check
      _
    $region55: #{tpu_custom_call.1} parent=1 // pred_check_branch
      %385 = sbr.rel (0) target = $region57
    $region56: #{tpu_custom_call.1} parent=1 // pred_region
      %386 = dma.done [#allocation4], 512
    $region57: #{tpu_custom_call.1} parent=1 // pred_fallthru
      _
    // Predicated region
    $region58: #{tpu_custom_call.1} parent=1 // pred_check
      _
    $region59: #{tpu_custom_call.1} parent=1 // pred_check_branch
      %388 = sbr.rel (0) target = $region61
    $region60: #{tpu_custom_call.1} parent=1 // pred_region
      %389 = dma.done [#allocation12], 512
    $region61: #{tpu_custom_call.1} parent=1 // pred_fallthru
      _
    // Predicated region
    $region62: #{tpu_custom_call.1} parent=1 // pred_check
      _
    $region63: #{tpu_custom_call.1} parent=1 // pred_check_branch
      %391 = sbr.rel (0) target = $region65
    $region64: #{tpu_custom_call.1} parent=1 // pred_region
      %392 = dma.done [#allocation12], 512
    $region65: #{tpu_custom_call.1} parent=1 // pred_fallthru
      _
    %393 = vsyncpa [#allocation3], 1
    %394 = vsyncpa [#allocation6], 1
    %395 = vsyncpa [#allocation9], 1
    %396 = vsyncpa [#allocation4], 1
    %397 = vsyncpa [#allocation12], 1

</llo_original>
